<compile_context>
chip_gen: v7x
topology: tpu7x:2x2x1
jax: 0.10.0
libtpu: 0.0.40
codegen_flags: <defaults>
</compile_context>

<pallas_src>
import jax
import jax.numpy as jnp
from jax.experimental import pallas as pl
from jax.experimental.pallas import tpu as pltpu


def _tanh_rep3_kernel(x_ref, o_ref):
    # x_ref: (rb, C) input tile; o_ref: (3, rb, C) output tile.
    # Compute tanh once (EUP), store it into all three replicas.
    t = jnp.tanh(x_ref[...])
    o_ref[0] = t
    o_ref[1] = t
    o_ref[2] = t


def _choose_layout(n, itemsize):
    """Factor flat length n into a lane-dense (R, C) slab plus row block rb.

    Returns (R, C, rb, n_pad) where n_pad = R*C >= n (padding only when n is
    not a multiple of 128).
    """
    # 1) Lane-dense column width (multiple of 128).  Prefer the widest
    #    candidate that divides n exactly (no padding); otherwise pad.
    C = None
    for c in (2048, 1024, 512, 256, 128):
        if n % c == 0:
            C = c
            break
    if C is None:
        C = 512 if n >= 512 else 128
    R = pl.cdiv(n, C)
    n_pad = R * C

    # 2) Row block: ~2 MiB input tiles (output tiles are 3x => ~6 MiB),
    #    sublane-aligned (multiple of 8) unless the whole R fits in one block.
    target_rows = max(8, (2 * 1024 * 1024) // (C * itemsize))
    rb = min(R, target_rows)
    if rb >= 8:
        rb -= rb % 8

    # 3) Make sure medium inputs still produce >= 8 grid steps so both v7x
    #    TensorCores get work and each keeps a >= 2-deep pipeline.  Large
    #    inputs already have >= 8 steps with the 2 MiB tiles and are untouched.
    steps = pl.cdiv(R, rb)
    while steps < 8 and rb > 8:
        rb = max(8, (rb // 2) - ((rb // 2) % 8))
        steps = pl.cdiv(R, rb)

    return R, C, rb, n_pad


def model_forward(x):
    """Equivalent of Model.forward for a 3-D input x of shape (B, S, D)."""
    B = x.shape[0]
    n = x.size
    itemsize = x.dtype.itemsize
    R, C, rb, n_pad = _choose_layout(n, itemsize)

    xf = x.reshape(-1)
    if n_pad != n:
        xf = jnp.pad(xf, (0, n_pad - n))  # tanh(0)=0 in the pad, sliced off below
    x2 = xf.reshape(R, C)  # free row-major reshape of the flat buffer

    grid = (pl.cdiv(R, rb),)
    in_spec = pl.BlockSpec((rb, C), lambda i: (i, 0))

    def run(out_spec):
        return pl.pallas_call(
            _tanh_rep3_kernel,
            out_shape=jax.ShapeDtypeStruct((3, R, C), x.dtype),
            grid=grid,
            in_specs=[in_spec],
            out_specs=out_spec,
            compiler_params=pltpu.CompilerParams(
                dimension_semantics=("parallel",),
                vmem_limit_bytes=32 * 1024 * 1024,
            ),
            cost_estimate=pl.CostEstimate(
                flops=0,
                transcendentals=n_pad,
                bytes_accessed=4 * n_pad * itemsize,  # 1 read + 3 writes
            ),
        )(x2)

    # Output writeback (3N) is the long pole of each step: ask for 3-deep
    # buffering if this JAX build supports it; otherwise default double-buffer.
    try:
        out3 = run(pl.BlockSpec((3, rb, C), lambda i: (0, i, 0),
                                pipeline_mode=pl.Buffered(3)))
    except Exception:
        out3 = run(pl.BlockSpec((3, rb, C), lambda i: (0, i, 0)))

    # (3, R, C) row-major flat buffer == [tanh(flat x padded)] * 3.
    if n_pad == n:
        return out3.reshape(B, -1)          # free reshape, no copy
    return out3.reshape(3, n_pad)[:, :n].reshape(B, -1)  # drop lane padding


def _reference(x):
    y = jnp.concatenate([x, x, x], axis=0)
    return jnp.tanh(y.reshape(x.shape[0], -1))


if __name__ == "__main__":
    key = jax.random.PRNGKey(0)
    k1, k2, k3 = jax.random.split(key, 3)

    # 1) Exact shape from the PyTorch spec: x = torch.randn(2, 3, 4)
    #    (n=24 -> padded lane-dense (1, 128) slab, padding sliced off).
    x_small = jax.random.normal(k1, (2, 3, 4), dtype=jnp.float32)
    z_small = model_forward(x_small)
    jax.block_until_ready(z_small)
    assert z_small.shape == (2, 36)
    assert jnp.allclose(z_small, _reference(x_small), atol=1e-5, rtol=1e-5)

    # 2) Moderate input exercising the lane-dense, multi-step pipelined path
    #    (C=2048, rb shrunk until grid has >= 8 steps for the v7x megacore).
    x_big = jax.random.normal(k2, (16, 128, 128), dtype=jnp.float32)
    z_big = model_forward(x_big)
    jax.block_until_ready(z_big)
    assert z_big.shape == (16, 3 * 128 * 128)
    assert jnp.allclose(z_big, _reference(x_big), atol=1e-5, rtol=1e-5)

    # 3) Awkward factorization (rows not a multiple of 8, cdiv grid with a
    #    partial last block) to exercise the hardened tiling path.
    x_odd = jax.random.normal(k3, (3, 7, 384), dtype=jnp.float32)
    z_odd = model_forward(x_odd)
    jax.block_until_ready(z_odd)
    assert z_odd.shape == (3, 3 * 7 * 384)
    assert jnp.allclose(z_odd, _reference(x_odd), atol=1e-5, rtol=1e-5)

    print("KERNEL_OK")
</pallas_src>

<mosaic_0001>
module attributes {stable_mosaic.version = 11 : i64} {
  func.func @_tanh_rep3_kernel(%arg0: i32, %arg1: memref<1x128xf32, #tpu.memory_space<vmem>>, %arg2: memref<3x1x128xf32, #tpu.memory_space<vmem>>) attributes {dimension_semantics = [#tpu.dimension_semantics<parallel>], iteration_bounds = array<i64: 1>, scalar_prefetch = 0 : i64, scratch_operands = 0 : i64, tpu.core_type = #tpu.core_type<tc>, window_params = [{transform_indices = @transform_0, window_bounds = array<i64: 1, 128>}, {transform_indices = @transform_1, window_bounds = array<i64: 3, 1, 128>}]} {
    %c0 = arith.constant 0 : index
    %c0_0 = arith.constant 0 : index
    %0 = vector.load %arg1[%c0, %c0_0] : memref<1x128xf32, #tpu.memory_space<vmem>>, vector<1x128xf32>
    %1 = math.tanh %0 : vector<1x128xf32>
    %c0_1 = arith.constant 0 : index
    %c0_2 = arith.constant 0 : index
    %c0_3 = arith.constant 0 : index
    %2 = vector.load %arg2[%c0_1, %c0_2, %c0_3] : memref<3x1x128xf32, #tpu.memory_space<vmem>>, vector<1x1x128xf32>
    %3 = vector.shape_cast %2 : vector<1x1x128xf32> to vector<1x128xf32>
    %4 = vector.shape_cast %1 : vector<1x128xf32> to vector<1x1x128xf32>
    tpu.vector_store %arg2[%c0_1, %c0_2, %c0_3], %4 {strides = array<i32>} : memref<3x1x128xf32, #tpu.memory_space<vmem>>, vector<1x1x128xf32>,
    %c1 = arith.constant 1 : index
    %c0_4 = arith.constant 0 : index
    %c0_5 = arith.constant 0 : index
    %5 = vector.load %arg2[%c1, %c0_4, %c0_5] : memref<3x1x128xf32, #tpu.memory_space<vmem>>, vector<1x1x128xf32>
    %6 = vector.shape_cast %5 : vector<1x1x128xf32> to vector<1x128xf32>
    %7 = vector.shape_cast %1 : vector<1x128xf32> to vector<1x1x128xf32>
    tpu.vector_store %arg2[%c1, %c0_4, %c0_5], %7 {strides = array<i32>} : memref<3x1x128xf32, #tpu.memory_space<vmem>>, vector<1x1x128xf32>,
    %c2 = arith.constant 2 : index
    %c0_6 = arith.constant 0 : index
    %c0_7 = arith.constant 0 : index
    %8 = vector.load %arg2[%c2, %c0_6, %c0_7] : memref<3x1x128xf32, #tpu.memory_space<vmem>>, vector<1x1x128xf32>
    %9 = vector.shape_cast %8 : vector<1x1x128xf32> to vector<1x128xf32>
    %10 = vector.shape_cast %1 : vector<1x128xf32> to vector<1x1x128xf32>
    tpu.vector_store %arg2[%c2, %c0_6, %c0_7], %10 {strides = array<i32>} : memref<3x1x128xf32, #tpu.memory_space<vmem>>, vector<1x1x128xf32>,
    return
  }
  func.func @transform_0(%arg0: i32) -> (i32, i32) {
    %c0_i32 = arith.constant 0 : i32
    %c0_i32_0 = arith.constant 0 : i32
    return %arg0, %c0_i32 : i32, i32
  }
  func.func @transform_1(%arg0: i32) -> (i32, i32, i32) {
    %c0_i32 = arith.constant 0 : i32
    %c0_i32_0 = arith.constant 0 : i32
    %c0_i32_1 = arith.constant 0 : i32
    return %c0_i32, %arg0, %c0_i32_0 : i32, i32, i32
  }
}

</mosaic_0001>

<llo_original>
// kernel: tpu_custom_call.1
$region0: #{tpu_custom_call.1}
  #allocation0 [shape = 'u32[]', space=smem, size = 0x4, offset = 0x4, fixed_abs, tag = 'smem constant byte address 0x4 - core index']
  #allocation1 [shape = 'u32[144,128]{1,0:T(1,128)}', space=vmem, size = 0x12000, scoped, tag = 'internal scratch']
  %s0 = inlined_call_operand.hbm [shape: f32[1,128], index: 0, kind: input, shape index: {}]
  %s1 = inlined_call_operand.hbm [shape: f32[3,1,128], index: 1, kind: output, shape index: {}]
  %s2 = sld [smem:[#allocation0]]
  $region18: #{tpu_custom_call.1} parent=0
    _
  %s4 = ssub.s32 1, %s2
  %s5 = scalar_select 0, %s4, %s2
  $region1: #{tpu_custom_call.1} parent=0
    #allocation2 [shape = 'u8[512]{0}', space=vmem, size = 0x400, scoped, tag = 'input window, operand 0, single buffered']
    #allocation3 [shape = 's32[1]{0}', space=sflag, size = 0x4, scoped, tag = 'scoped memory for tpu_custom_call.1']
    #allocation4 [shape = 's32[1]{0}', space=sflag, size = 0x4, scoped, tag = 'scoped memory for tpu_custom_call.1']
    #allocation5 [shape = 'u8[1536]{0}', space=vmem, size = 0x800, scoped, tag = 'output window, operand 0, single buffered']
    %6 = vsyncpa [#allocation3], 0
    %7 = vsyncpa [#allocation4], 0
    // Predicated region
    $region2: #{tpu_custom_call.1} parent=1 // pred_check
      _
    $region3: #{tpu_custom_call.1} parent=1 // pred_check_branch
      %9 = sbr.rel (0) target = $region5
    $region4: #{tpu_custom_call.1} parent=1 // pred_region
      %s11 = ssub.s32 16, 16
      %12 = vsyncadd [#allocation3], %s11
      %s14 = sshll.u32 [#allocation2], 4
      %s15 = int_to_ptr.vmem [resolvable:$true] %s14
      %17 = dma.hbm_to_vmem [thread:$0]  %s0, 16, %s15, [#allocation3]
    $region5: #{tpu_custom_call.1} parent=1 // pred_fallthru
      _
    // Predicated region
    $region6: #{tpu_custom_call.1} parent=1 // pred_check
      _
    $region7: #{tpu_custom_call.1} parent=1 // pred_check_branch
      %19 = sbr.rel (0) target = $region9
    $region8: #{tpu_custom_call.1} parent=1 // pred_region
      %20 = dma.done [#allocation3], 16
    $region9: #{tpu_custom_call.1} parent=1 // pred_fallthru
      _
    %v21 = vld [vmem:[#allocation2] sm:$0x1]
    %v22 = vtanh.pop %v21
    %23 = vst [vmem:[#allocation5] sm:$0x1] %v22
    %s24 = scalar_lea.vmem [#allocation5], 1
    %25 = vst [vmem:[%s24] sm:$0x1] %v22
    %s26 = scalar_lea.vmem [#allocation5], 2
    %27 = vst [vmem:[%s26] sm:$0x1] %v22
    // Predicated region
    $region10: #{tpu_custom_call.1} parent=1 // pred_check
      _
    $region11: #{tpu_custom_call.1} parent=1 // pred_check_branch
      %29 = sbr.rel (0) target = $region13
    $region12: #{tpu_custom_call.1} parent=1 // pred_region
      %s31 = ssub.s32 48, 48
      %32 = vsyncadd [#allocation4], %s31
      %s33 = sshll.u32 [#allocation5], 4
      %s34 = int_to_ptr.vmem [resolvable:$true] %s33
      %39 = dma.vmem_to_hbm [thread:$0]  %s34, 48, %s1, [#allocation4], 16, 16, 1
    $region13: #{tpu_custom_call.1} parent=1 // pred_fallthru
      _
    // Predicated region
    $region14: #{tpu_custom_call.1} parent=1 // pred_check
      _
    $region15: #{tpu_custom_call.1} parent=1 // pred_check_branch
      %41 = sbr.rel (0) target = $region17
    $region16: #{tpu_custom_call.1} parent=1 // pred_region
      %42 = dma.done [#allocation4], 48
    $region17: #{tpu_custom_call.1} parent=1 // pred_fallthru
      _
    %43 = vsyncpa [#allocation3], 1
    %44 = vsyncpa [#allocation4], 1

</llo_original>
